<compile_context>
chip_gen: v5e
topology: v5e:2x2
jax: 0.10.0
libtpu: 0.0.40
codegen_flags: <defaults>
</compile_context>

<pallas_src>
import functools

import jax
import jax.numpy as jnp
from jax.experimental import pallas as pl
from jax.experimental.pallas import tpu as pltpu


def chebnet_fused_kernel(ahat_ref, x_ref, *refs, k):
    """Fused forward over all ChebConv layers.

    refs = (w_0, b_0, w_1, b_1, ..., w_{L-1}, b_{L-1}, o_ref)
    w_l : (k*fin_l, fout_l) sign-folded weights;  b_l : (1, fout_l).
    """
    o_ref = refs[-1]
    wb_refs = refs[:-1]
    num_layers = len(wb_refs) // 2

    ahat = ahat_ref[...]
    ahat2 = ahat + ahat          # 2 * A_hat, computed once for the whole network
    h = x_ref[...]

    for li in range(num_layers):
        w = wb_refs[2 * li][...]
        b = wb_refs[2 * li + 1][...]

        # Sign-flipped Chebyshev recursion T_i = 2*A_hat T_{i-1} - T_{i-2}.
        # ((-1)^t factors are pre-folded into w, so no negations / scalar muls here.)
        terms = [h]
        if k > 1:
            t1 = jnp.dot(ahat, h, preferred_element_type=jnp.float32)
            terms.append(t1)
            t_prev2, t_prev1 = h, t1
            for _ in range(2, k):
                ti = jnp.dot(ahat2, t_prev1,
                             preferred_element_type=jnp.float32) - t_prev2
                terms.append(ti)
                t_prev2, t_prev1 = t_prev1, ti

        # Single GEMM on the lane-concatenated basis instead of k tiny matmuls.
        xcat = terms[0] if k == 1 else jnp.concatenate(terms, axis=-1)
        z = jnp.dot(xcat, w, preferred_element_type=jnp.float32) + b
        h = jnp.maximum(z, 0.0)              # ReLU (DGL ChebConv default activation)

    o_ref[...] = h.astype(o_ref.dtype)       # one store at the very end


def chebnet_forward(ahat, features, params, k):
    """Run the full ChebNet forward in one pallas_call.

    params: list of (w, b) with w of shape (k*fin, fout)  (== nn.Linear(k*fin, fout).weight.T)
    """
    n = features.shape[0]
    n_classes = params[-1][0].shape[1]

    # Fold the (-1)^t Chebyshev signs into the weight slices (mathematically exact):
    #   sum_t X_t W_t == sum_t T_t ((-1)^t W_t)   since X_t = (-1)^t T_t.
    flat_inputs = []
    for w, b in params:
        fin = w.shape[0] // k
        signs = jnp.repeat(
            jnp.array([(-1.0) ** t for t in range(k)], jnp.float32), fin)
        flat_inputs.append(w * signs[:, None])
        flat_inputs.append(b)

    kern = functools.partial(chebnet_fused_kernel, k=k)
    n_inputs = 2 + len(flat_inputs)

    # TODO(synk): for large graphs (N >~ 2.5k nodes on v7x / ~5k on v6e) switch to a
    # node-row-tiled grid with BlockSpec pipelining, a "parallel" row axis (v7x has
    # 2 TCs) and an explicit vmem_limit_bytes; at N=64 the whole problem fits in VMEM.
    return pl.pallas_call(
        kern,
        out_shape=jax.ShapeDtypeStruct((n, n_classes), jnp.float32),
        in_specs=[pl.BlockSpec(memory_space=pltpu.MemorySpace.VMEM)] * n_inputs,
        out_specs=pl.BlockSpec(memory_space=pltpu.MemorySpace.VMEM),
    )(ahat, features, *flat_inputs)


def init_chebnet_params(key, in_feats, n_classes, n_hidden, n_layers, k):
    """Deterministic nn.Linear(k*fin, fout)-style init (U(-1/sqrt(fan_in), ...))."""
    dims = ([(in_feats, n_hidden)]
            + [(n_hidden, n_hidden)] * (n_layers - 1)
            + [(n_hidden, n_classes)])
    params = []
    for fi, fo in dims:
        key, kw, kb = jax.random.split(key, 3)
        bound = 1.0 / float(jnp.sqrt(k * fi))
        w = jax.random.uniform(kw, (k * fi, fo), jnp.float32, -bound, bound)
        b = jax.random.uniform(kb, (1, fo), jnp.float32, -bound, bound)
        params.append((w, b))
    return params


if __name__ == "__main__":
    N, in_feats, n_hidden, n_classes, n_layers, k = 64, 16, 32, 8, 2, 3

    key = jax.random.PRNGKey(0)
    key, ka, kf, kp = jax.random.split(key, 4)

    # Synthetic undirected graph: symmetric 0/1 adjacency, no self-loops.
    upper = (jax.random.uniform(ka, (N, N)) < 0.1).astype(jnp.float32)
    upper = jnp.triu(upper, 1)
    adj = upper + upper.T

    # Normalized adjacency A_hat = D^-1/2 A D^-1/2, in-degrees clamped to >= 1
    # (matches DGL ChebConv's in_degrees().clamp(min=1)^-0.5).
    deg = jnp.maximum(jnp.sum(adj, axis=0), 1.0)
    d_invsqrt = 1.0 / jnp.sqrt(deg)
    ahat = d_invsqrt[:, None] * adj * d_invsqrt[None, :]

    features = jax.random.normal(kf, (N, in_feats), jnp.float32)
    params = init_chebnet_params(kp, in_feats, n_classes, n_hidden, n_layers, k)

    out = chebnet_forward(ahat, features, params, k)
    jax.block_until_ready(out)
    assert out.shape == (N, n_classes)
    print("KERNEL_OK")
</pallas_src>

<mosaic_0001>
module attributes {stable_mosaic.version = 11 : i64} {
  func.func @chebnet_fused_kernel(%arg0: memref<64x64xf32, #tpu.memory_space<vmem>>, %arg1: memref<64x16xf32, #tpu.memory_space<vmem>>, %arg2: memref<48x32xf32, #tpu.memory_space<vmem>>, %arg3: memref<1x32xf32, #tpu.memory_space<vmem>>, %arg4: memref<96x32xf32, #tpu.memory_space<vmem>>, %arg5: memref<1x32xf32, #tpu.memory_space<vmem>>, %arg6: memref<96x8xf32, #tpu.memory_space<vmem>>, %arg7: memref<1x8xf32, #tpu.memory_space<vmem>>, %arg8: memref<64x8xf32, #tpu.memory_space<vmem>>) attributes {dimension_semantics = [], scalar_prefetch = 0 : i64, scratch_operands = 0 : i64, tpu.core_type = #tpu.core_type<tc>} {
    %c0 = arith.constant 0 : index
    %c0_0 = arith.constant 0 : index
    %0 = vector.load %arg0[%c0, %c0_0] : memref<64x64xf32, #tpu.memory_space<vmem>>, vector<64x64xf32>
    %1 = arith.addf %0, %0 : vector<64x64xf32>
    %c0_1 = arith.constant 0 : index
    %c0_2 = arith.constant 0 : index
    %2 = vector.load %arg1[%c0_1, %c0_2] : memref<64x16xf32, #tpu.memory_space<vmem>>, vector<64x16xf32>
    %c0_3 = arith.constant 0 : index
    %c0_4 = arith.constant 0 : index
    %3 = vector.load %arg2[%c0_3, %c0_4] : memref<48x32xf32, #tpu.memory_space<vmem>>, vector<48x32xf32>
    %c0_5 = arith.constant 0 : index
    %c0_6 = arith.constant 0 : index
    %4 = vector.load %arg3[%c0_5, %c0_6] : memref<1x32xf32, #tpu.memory_space<vmem>>, vector<1x32xf32>
    %cst = arith.constant dense<0.000000e+00> : vector<64x16xf32>
    %5 = tpu.matmul %0, %2, %cst {dimension_numbers = #tpu.dot_dimension_numbers<[1], [0], [0], [1], [0, 0, 1, 1], [], []>} : vector<64x64xf32>, vector<64x16xf32>, vector<64x16xf32> -> vector<64x16xf32>
    %cst_7 = arith.constant dense<0.000000e+00> : vector<64x16xf32>
    %6 = tpu.matmul %1, %5, %cst_7 {dimension_numbers = #tpu.dot_dimension_numbers<[1], [0], [0], [1], [0, 0, 1, 1], [], []>} : vector<64x64xf32>, vector<64x16xf32>, vector<64x16xf32> -> vector<64x16xf32>
    %7 = arith.subf %6, %2 : vector<64x16xf32>
    %8 = tpu.concatenate %2, %5, %7 in 1 : vector<64x16xf32>, vector<64x16xf32>, vector<64x16xf32> -> vector<64x48xf32>
    %cst_8 = arith.constant dense<0.000000e+00> : vector<64x32xf32>
    %9 = tpu.matmul %8, %3, %cst_8 {dimension_numbers = #tpu.dot_dimension_numbers<[1], [0], [0], [1], [0, 0, 1, 1], [], []>} : vector<64x48xf32>, vector<48x32xf32>, vector<64x32xf32> -> vector<64x32xf32>
    %10 = vector.broadcast %4 : vector<1x32xf32> to vector<64x32xf32>
    %11 = arith.addf %9, %10 : vector<64x32xf32>
    %cst_9 = arith.constant 0.000000e+00 : f32
    %12 = vector.broadcast %cst_9 : f32 to vector<64x32xf32>
    %13 = arith.maximumf %11, %12 : vector<64x32xf32>
    %c0_10 = arith.constant 0 : index
    %c0_11 = arith.constant 0 : index
    %14 = vector.load %arg4[%c0_10, %c0_11] : memref<96x32xf32, #tpu.memory_space<vmem>>, vector<96x32xf32>
    %c0_12 = arith.constant 0 : index
    %c0_13 = arith.constant 0 : index
    %15 = vector.load %arg5[%c0_12, %c0_13] : memref<1x32xf32, #tpu.memory_space<vmem>>, vector<1x32xf32>
    %cst_14 = arith.constant dense<0.000000e+00> : vector<64x32xf32>
    %16 = tpu.matmul %0, %13, %cst_14 {dimension_numbers = #tpu.dot_dimension_numbers<[1], [0], [0], [1], [0, 0, 1, 1], [], []>} : vector<64x64xf32>, vector<64x32xf32>, vector<64x32xf32> -> vector<64x32xf32>
    %cst_15 = arith.constant dense<0.000000e+00> : vector<64x32xf32>
    %17 = tpu.matmul %1, %16, %cst_15 {dimension_numbers = #tpu.dot_dimension_numbers<[1], [0], [0], [1], [0, 0, 1, 1], [], []>} : vector<64x64xf32>, vector<64x32xf32>, vector<64x32xf32> -> vector<64x32xf32>
    %18 = arith.subf %17, %13 : vector<64x32xf32>
    %19 = tpu.concatenate %13, %16, %18 in 1 : vector<64x32xf32>, vector<64x32xf32>, vector<64x32xf32> -> vector<64x96xf32>
    %cst_16 = arith.constant dense<0.000000e+00> : vector<64x32xf32>
    %20 = tpu.matmul %19, %14, %cst_16 {dimension_numbers = #tpu.dot_dimension_numbers<[1], [0], [0], [1], [0, 0, 1, 1], [], []>} : vector<64x96xf32>, vector<96x32xf32>, vector<64x32xf32> -> vector<64x32xf32>
    %21 = vector.broadcast %15 : vector<1x32xf32> to vector<64x32xf32>
    %22 = arith.addf %20, %21 : vector<64x32xf32>
    %cst_17 = arith.constant 0.000000e+00 : f32
    %23 = vector.broadcast %cst_17 : f32 to vector<64x32xf32>
    %24 = arith.maximumf %22, %23 : vector<64x32xf32>
    %c0_18 = arith.constant 0 : index
    %c0_19 = arith.constant 0 : index
    %25 = vector.load %arg6[%c0_18, %c0_19] : memref<96x8xf32, #tpu.memory_space<vmem>>, vector<96x8xf32>
    %c0_20 = arith.constant 0 : index
    %c0_21 = arith.constant 0 : index
    %26 = vector.load %arg7[%c0_20, %c0_21] : memref<1x8xf32, #tpu.memory_space<vmem>>, vector<1x8xf32>
    %cst_22 = arith.constant dense<0.000000e+00> : vector<64x32xf32>
    %27 = tpu.matmul %0, %24, %cst_22 {dimension_numbers = #tpu.dot_dimension_numbers<[1], [0], [0], [1], [0, 0, 1, 1], [], []>} : vector<64x64xf32>, vector<64x32xf32>, vector<64x32xf32> -> vector<64x32xf32>
    %cst_23 = arith.constant dense<0.000000e+00> : vector<64x32xf32>
    %28 = tpu.matmul %1, %27, %cst_23 {dimension_numbers = #tpu.dot_dimension_numbers<[1], [0], [0], [1], [0, 0, 1, 1], [], []>} : vector<64x64xf32>, vector<64x32xf32>, vector<64x32xf32> -> vector<64x32xf32>
    %29 = arith.subf %28, %24 : vector<64x32xf32>
    %30 = tpu.concatenate %24, %27, %29 in 1 : vector<64x32xf32>, vector<64x32xf32>, vector<64x32xf32> -> vector<64x96xf32>
    %cst_24 = arith.constant dense<0.000000e+00> : vector<64x8xf32>
    %31 = tpu.matmul %30, %25, %cst_24 {dimension_numbers = #tpu.dot_dimension_numbers<[1], [0], [0], [1], [0, 0, 1, 1], [], []>} : vector<64x96xf32>, vector<96x8xf32>, vector<64x8xf32> -> vector<64x8xf32>
    %32 = vector.broadcast %26 : vector<1x8xf32> to vector<64x8xf32>
    %33 = arith.addf %31, %32 : vector<64x8xf32>
    %cst_25 = arith.constant 0.000000e+00 : f32
    %34 = vector.broadcast %cst_25 : f32 to vector<64x8xf32>
    %35 = arith.maximumf %33, %34 : vector<64x8xf32>
    %c0_26 = arith.constant 0 : index
    %c0_27 = arith.constant 0 : index
    %36 = vector.load %arg8[%c0_26, %c0_27] : memref<64x8xf32, #tpu.memory_space<vmem>>, vector<64x8xf32>
    tpu.vector_store %arg8[%c0_26, %c0_27], %35 {strides = array<i32>} : memref<64x8xf32, #tpu.memory_space<vmem>>, vector<64x8xf32>,
    return
  }
}

</mosaic_0001>

<llo_original>
// kernel: tpu_custom_call.1
$region0: #{tpu_custom_call.1}
  #allocation0 [shape = 'u32[]', space=smem, size = 0x4, offset = 0x4, fixed_abs, tag = 'smem constant byte address 0x4 - core index']
  #allocation1 [shape = 'u32[72,128]{1,0:T(1,128)}', space=vmem, size = 0x9000, scoped, tag = 'internal scratch']
  %s0 = inlined_call_operand.vmem [shape: f32[64,64], index: 0, kind: input, shape index: {}]
  %s1 = inlined_call_operand.vmem [shape: f32[64,16], index: 1, kind: input, shape index: {}]
  %s2 = inlined_call_operand.vmem [shape: f32[48,32], index: 2, kind: input, shape index: {}]
  %s3 = inlined_call_operand.vmem [shape: f32[1,32], index: 3, kind: input, shape index: {}]
  %s4 = inlined_call_operand.vmem [shape: f32[96,32], index: 4, kind: input, shape index: {}]
  %s5 = inlined_call_operand.vmem [shape: f32[1,32], index: 5, kind: input, shape index: {}]
  %s6 = inlined_call_operand.vmem [shape: f32[96,8], index: 6, kind: input, shape index: {}]
  %s7 = inlined_call_operand.vmem [shape: f32[1,8], index: 7, kind: input, shape index: {}]
  %s8 = inlined_call_operand.vmem [shape: f32[64,8], index: 8, kind: output, shape index: {}]
  %s9 = sld [smem:[#allocation0]]
  $region42: #{tpu_custom_call.1} parent=0
    _
  %s11 = ssub.s32 1, %s9
  %s12 = scalar_select 0, %s11, %s9
  // Predicated region
  $region2: #{tpu_custom_call.1} parent=0 // pred_check
    _
  $region3: #{tpu_custom_call.1} parent=0 // pred_check_branch
    %14 = sbr.rel (0) target = $region5
  $region4: #{tpu_custom_call.1} parent=0 // pred_region
    _
  $region5: #{tpu_custom_call.1} parent=0 // pred_fallthru
    _
  // Predicated region
  $region6: #{tpu_custom_call.1} parent=0 // pred_check
    _
  $region7: #{tpu_custom_call.1} parent=0 // pred_check_branch
    %16 = sbr.rel (0) target = $region9
  $region8: #{tpu_custom_call.1} parent=0 // pred_region
    _
  $region9: #{tpu_custom_call.1} parent=0 // pred_fallthru
    _
  // Predicated region
  $region10: #{tpu_custom_call.1} parent=0 // pred_check
    _
  $region11: #{tpu_custom_call.1} parent=0 // pred_check_branch
    %18 = sbr.rel (0) target = $region13
  $region12: #{tpu_custom_call.1} parent=0 // pred_region
    _
  $region13: #{tpu_custom_call.1} parent=0 // pred_fallthru
    _
  // Predicated region
  $region14: #{tpu_custom_call.1} parent=0 // pred_check
    _
  $region15: #{tpu_custom_call.1} parent=0 // pred_check_branch
    %20 = sbr.rel (0) target = $region17
  $region16: #{tpu_custom_call.1} parent=0 // pred_region
    _
  $region17: #{tpu_custom_call.1} parent=0 // pred_fallthru
    _
  // Predicated region
  $region18: #{tpu_custom_call.1} parent=0 // pred_check
    _
  $region19: #{tpu_custom_call.1} parent=0 // pred_check_branch
    %22 = sbr.rel (0) target = $region21
  $region20: #{tpu_custom_call.1} parent=0 // pred_region
    _
  $region21: #{tpu_custom_call.1} parent=0 // pred_fallthru
    _
  // Predicated region
  $region22: #{tpu_custom_call.1} parent=0 // pred_check
    _
  $region23: #{tpu_custom_call.1} parent=0 // pred_check_branch
    %24 = sbr.rel (0) target = $region25
  $region24: #{tpu_custom_call.1} parent=0 // pred_region
    _
  $region25: #{tpu_custom_call.1} parent=0 // pred_fallthru
    _
  // Predicated region
  $region26: #{tpu_custom_call.1} parent=0 // pred_check
    _
  $region27: #{tpu_custom_call.1} parent=0 // pred_check_branch
    %26 = sbr.rel (0) target = $region29
  $region28: #{tpu_custom_call.1} parent=0 // pred_region
    _
  $region29: #{tpu_custom_call.1} parent=0 // pred_fallthru
    _
  // Predicated region
  $region30: #{tpu_custom_call.1} parent=0 // pred_check
    _
  $region31: #{tpu_custom_call.1} parent=0 // pred_check_branch
    %28 = sbr.rel (0) target = $region33
  $region32: #{tpu_custom_call.1} parent=0 // pred_region
    _
  $region33: #{tpu_custom_call.1} parent=0 // pred_fallthru
    _
  %v29 = vld [vmem:[%s0] sm:$0xff]
  %v30 = vld [vmem:[%s0 + $0x8] sm:$0xff]
  %v31 = vld [vmem:[%s0 + $0x10] sm:$0xff]
  %v32 = vld [vmem:[%s0 + $0x18] sm:$0xff]
  %v33 = vld [vmem:[%s0 + $0x20] sm:$0xff]
  %v34 = vld [vmem:[%s0 + $0x28] sm:$0xff]
  %v35 = vld [vmem:[%s0 + $0x30] sm:$0xff]
  %v36 = vld [vmem:[%s0 + $0x38] sm:$0xff]
  %v37 = vadd.f32 %v29, %v29
  %v38 = vadd.f32 %v30, %v30
  %v39 = vadd.f32 %v31, %v31
  %v40 = vadd.f32 %v32, %v32
  %v41 = vadd.f32 %v33, %v33
  %v42 = vadd.f32 %v34, %v34
  %v43 = vadd.f32 %v35, %v35
  %v44 = vadd.f32 %v36, %v36
  %v45 = vld [vmem:[%s1] sm:$0xff]
  %v46 = vld [vmem:[%s1 + $0x8] sm:$0xff]
  %v47 = vld [vmem:[%s1 + $0x10] sm:$0xff]
  %v48 = vld [vmem:[%s1 + $0x18] sm:$0xff]
  %v49 = vld [vmem:[%s1 + $0x20] sm:$0xff]
  %v50 = vld [vmem:[%s1 + $0x28] sm:$0xff]
  %v51 = vld [vmem:[%s1 + $0x30] sm:$0xff]
  %v52 = vld [vmem:[%s1 + $0x38] sm:$0xff]
  %v53 = vld [vmem:[%s2] sm:$0xff]
  %v54 = vld [vmem:[%s2 + $0x8] sm:$0xff]
  %v55 = vld [vmem:[%s2 + $0x10] sm:$0xff]
  %v56 = vld [vmem:[%s2 + $0x18] sm:$0xff]
  %v57 = vld [vmem:[%s2 + $0x20] sm:$0xff]
  %v58 = vld [vmem:[%s2 + $0x28] sm:$0xff]
  %v59 = vld [vmem:[%s3] sm:$0x1]
  %vm60 = vcmask 523264
  %v62 = vsel %vm60, %v29, 0
  %v65 = vsel %vm60, %v30, 0
  %v68 = vsel %vm60, %v31, 0
  %v71 = vsel %vm60, %v32, 0
  %v74 = vsel %vm60, %v33, 0
  %v77 = vsel %vm60, %v34, 0
  %v80 = vsel %vm60, %v35, 0
  %v83 = vsel %vm60, %v36, 0
  %85 = vmatpush.msra.mxu0 0.0
  %86 = vmatpush.msra.mxu0 0.0
  %87 = vmatpush.msra.mxu0 0.0
  %88 = vmatpush.msra.mxu0 0.0
  %89 = vmatpush.msra.mxu0 0.0
  %90 = vmatpush.msra.mxu0 0.0
  %91 = vmatpush.msra.mxu0 0.0
  %92 = vmatpush.msra.mxu0 0.0
  %93 = vmatpush.msra.mxu0 %v52
  %94 = vmatpush.msra.mxu0 %v51
  %95 = vmatpush.msra.mxu0 %v50
  %96 = vmatpush.msra.mxu0 %v49
  %97 = vmatpush.msra.mxu0 %v48
  %98 = vmatpush.msra.mxu0 %v47
  %99 = vmatpush.msra.mxu0 %v46
  %100 = vmatpush.msra.mxu0 %v45
  %101 = vmatmul.f32.gmra.mxu0 %v62
  %v102 = vpop.f32.mrf.mxu0
  %v103 = vadd.f32 0.0, %v102
  %104 = vmatmul.f32.gmra.mxu0 %v65
  %v105 = vpop.f32.mrf.mxu0
  %v106 = vadd.f32 0.0, %v105
  %107 = vmatmul.f32.gmra.mxu0 %v68
  %v108 = vpop.f32.mrf.mxu0
  %v109 = vadd.f32 0.0, %v108
  %110 = vmatmul.f32.gmra.mxu0 %v71
  %v111 = vpop.f32.mrf.mxu0
  %v112 = vadd.f32 0.0, %v111
  %113 = vmatmul.f32.gmra.mxu0 %v74
  %v114 = vpop.f32.mrf.mxu0
  %v115 = vadd.f32 0.0, %v114
  %116 = vmatmul.f32.gmra.mxu0 %v77
  %v117 = vpop.f32.mrf.mxu0
  %v118 = vadd.f32 0.0, %v117
  %119 = vmatmul.f32.gmra.mxu0 %v80
  %v120 = vpop.f32.mrf.mxu0
  %v121 = vadd.f32 0.0, %v120
  %122 = vmatmul.f32.gmra.mxu0 %v83
  %v123 = vpop.f32.mrf.mxu0
  %v124 = vadd.f32 0.0, %v123
  %125 = vdwg.mxu0
  %v127 = vsel %vm60, %v37, 0
  %v130 = vsel %vm60, %v38, 0
  %v133 = vsel %vm60, %v39, 0
  %v136 = vsel %vm60, %v40, 0
  %v139 = vsel %vm60, %v41, 0
  %v142 = vsel %vm60, %v42, 0
  %v145 = vsel %vm60, %v43, 0
  %v148 = vsel %vm60, %v44, 0
  %150 = vmatpush.msra.mxu0 0.0
  %151 = vmatpush.msra.mxu0 0.0
  %152 = vmatpush.msra.mxu0 0.0
  %153 = vmatpush.msra.mxu0 0.0
  %154 = vmatpush.msra.mxu0 0.0
  %155 = vmatpush.msra.mxu0 0.0
  %156 = vmatpush.msra.mxu0 0.0
  %157 = vmatpush.msra.mxu0 0.0
  %158 = vmatpush.msra.mxu0 %v124
  %159 = vmatpush.msra.mxu0 %v121
  %160 = vmatpush.msra.mxu0 %v118
  %161 = vmatpush.msra.mxu0 %v115
  %162 = vmatpush.msra.mxu0 %v112
  %163 = vmatpush.msra.mxu0 %v109
  %164 = vmatpush.msra.mxu0 %v106
  %165 = vmatpush.msra.mxu0 %v103
  %166 = vmatmul.f32.gmra.mxu0 %v127
  %v167 = vpop.f32.mrf.mxu0
  %v168 = vadd.f32 0.0, %v167
  %169 = vmatmul.f32.gmra.mxu0 %v130
  %v170 = vpop.f32.mrf.mxu0
  %v171 = vadd.f32 0.0, %v170
  %172 = vmatmul.f32.gmra.mxu0 %v133
  %v173 = vpop.f32.mrf.mxu0
  %v174 = vadd.f32 0.0, %v173
  %175 = vmatmul.f32.gmra.mxu0 %v136
  %v176 = vpop.f32.mrf.mxu0
  %v177 = vadd.f32 0.0, %v176
  %178 = vmatmul.f32.gmra.mxu0 %v139
  %v179 = vpop.f32.mrf.mxu0
  %v180 = vadd.f32 0.0, %v179
  %181 = vmatmul.f32.gmra.mxu0 %v142
  %v182 = vpop.f32.mrf.mxu0
  %v183 = vadd.f32 0.0, %v182
  %184 = vmatmul.f32.gmra.mxu0 %v145
  %v185 = vpop.f32.mrf.mxu0
  %v186 = vadd.f32 0.0, %v185
  %187 = vmatmul.f32.gmra.mxu0 %v148
  %v188 = vpop.f32.mrf.mxu0
  %v189 = vadd.f32 0.0, %v188
  %190 = vdwg.mxu0
  %v191 = vsub.f32 %v168, %v45
  %v192 = vsub.f32 %v171, %v46
  %v193 = vsub.f32 %v174, %v47
  %v194 = vsub.f32 %v177, %v48
  %v195 = vsub.f32 %v180, %v49
  %v196 = vsub.f32 %v183, %v50
  %v197 = vsub.f32 %v186, %v51
  %v198 = vsub.f32 %v189, %v52
  %207 = vrot.lane.b32.xlu0 %v103, 16
  %v208 = vpop.permute.xlu0 %207
  %209 = vrot.lane.b32.xlu0 %v106, 16
  %v210 = vpop.permute.xlu0 %209
  %211 = vrot.lane.b32.xlu0 %v109, 16
  %v212 = vpop.permute.xlu0 %211
  %213 = vrot.lane.b32.xlu0 %v112, 16
  %v214 = vpop.permute.xlu0 %213
  %215 = vrot.lane.b32.xlu0 %v115, 16
  %v216 = vpop.permute.xlu0 %215
  %217 = vrot.lane.b32.xlu0 %v118, 16
  %v218 = vpop.permute.xlu0 %217
  %219 = vrot.lane.b32.xlu0 %v121, 16
  %v220 = vpop.permute.xlu0 %219
  %221 = vrot.lane.b32.xlu0 %v124, 16
  %v222 = vpop.permute.xlu0 %221
  %239 = vrot.lane.b32.xlu0 %v191, 32
  %v240 = vpop.permute.xlu0 %239
  %241 = vrot.lane.b32.xlu0 %v192, 32
  %v242 = vpop.permute.xlu0 %241
  %243 = vrot.lane.b32.xlu0 %v193, 32
  %v244 = vpop.permute.xlu0 %243
  %245 = vrot.lane.b32.xlu0 %v194, 32
  %v246 = vpop.permute.xlu0 %245
  %247 = vrot.lane.b32.xlu0 %v195, 32
  %v248 = vpop.permute.xlu0 %247
  %249 = vrot.lane.b32.xlu0 %v196, 32
  %v250 = vpop.permute.xlu0 %249
  %251 = vrot.lane.b32.xlu0 %v197, 32
  %v252 = vpop.permute.xlu0 %251
  %253 = vrot.lane.b32.xlu0 %v198, 32
  %v254 = vpop.permute.xlu0 %253
  %vm263 = vcmask 130048
  %v264 = vsel %vm263, %v45, %v208
  %v265 = vsel %vm263, %v46, %v210
  %v266 = vsel %vm263, %v47, %v212
  %v267 = vsel %vm263, %v48, %v214
  %v268 = vsel %vm263, %v49, %v216
  %v269 = vsel %vm263, %v50, %v218
  %v270 = vsel %vm263, %v51, %v220
  %v271 = vsel %vm263, %v52, %v222
  %vm272 = vcmask 261120
  %v273 = vsel %vm272, %v264, %v240
  %v274 = vsel %vm272, %v265, %v242
  %v275 = vsel %vm272, %v266, %v244
  %v276 = vsel %vm272, %v267, %v246
  %v277 = vsel %vm272, %v268, %v248
  %v278 = vsel %vm272, %v269, %v250
  %v279 = vsel %vm272, %v270, %v252
  %v280 = vsel %vm272, %v271, %v254
  %v282 = vperm.slane %v59, 0
  %vm284 = vcmask 392192
  %v286 = vsel %vm284, %v273, 0
  %v289 = vsel %vm284, %v274, 0
  %v292 = vsel %vm284, %v275, 0
  %v295 = vsel %vm284, %v276, 0
  %v298 = vsel %vm284, %v277, 0
  %v301 = vsel %vm284, %v278, 0
  %v304 = vsel %vm284, %v279, 0
  %v307 = vsel %vm284, %v280, 0
  %309 = vmatpush.msra.mxu0 0.0
  %310 = vmatpush.msra.mxu0 0.0
  %311 = vmatpush.msra.mxu0 0.0
  %312 = vmatpush.msra.mxu0 0.0
  %313 = vmatpush.msra.mxu0 0.0
  %314 = vmatpush.msra.mxu0 0.0
  %315 = vmatpush.msra.mxu0 0.0
  %316 = vmatpush.msra.mxu0 0.0
  %317 = vmatpush.msra.mxu0 0.0
  %318 = vmatpush.msra.mxu0 0.0
  %319 = vmatpush.msra.mxu0 %v58
  %320 = vmatpush.msra.mxu0 %v57
  %321 = vmatpush.msra.mxu0 %v56
  %322 = vmatpush.msra.mxu0 %v55
  %323 = vmatpush.msra.mxu0 %v54
  %324 = vmatpush.msra.mxu0 %v53
  %325 = vmatmul.f32.gmra.mxu0 %v286
  %v326 = vpop.f32.mrf.mxu0
  %v327 = vadd.f32 %v282, %v326
  %328 = vmatmul.f32.gmra.mxu0 %v289
  %v329 = vpop.f32.mrf.mxu0
  %v330 = vadd.f32 %v282, %v329
  %331 = vmatmul.f32.gmra.mxu0 %v292
  %v332 = vpop.f32.mrf.mxu0
  %v333 = vadd.f32 %v282, %v332
  %334 = vmatmul.f32.gmra.mxu0 %v295
  %v335 = vpop.f32.mrf.mxu0
  %v336 = vadd.f32 %v282, %v335
  %337 = vmatmul.f32.gmra.mxu0 %v298
  %v338 = vpop.f32.mrf.mxu0
  %v339 = vadd.f32 %v282, %v338
  %340 = vmatmul.f32.gmra.mxu0 %v301
  %v341 = vpop.f32.mrf.mxu0
  %v342 = vadd.f32 %v282, %v341
  %343 = vmatmul.f32.gmra.mxu0 %v304
  %v344 = vpop.f32.mrf.mxu0
  %v345 = vadd.f32 %v282, %v344
  %346 = vmatmul.f32.gmra.mxu0 %v307
  %v347 = vpop.f32.mrf.mxu0
  %v348 = vadd.f32 %v282, %v347
  %349 = vdwg.mxu0
  %v350 = vmax.f32 %v327, 0.0
  %v351 = vmax.f32 %v330, 0.0
  %v352 = vmax.f32 %v333, 0.0
  %v353 = vmax.f32 %v336, 0.0
  %v354 = vmax.f32 %v339, 0.0
  %v355 = vmax.f32 %v342, 0.0
  %v356 = vmax.f32 %v345, 0.0
  %v357 = vmax.f32 %v348, 0.0
  %v358 = vld [vmem:[%s4] sm:$0xff]
  %v359 = vld [vmem:[%s4 + $0x8] sm:$0xff]
  %v360 = vld [vmem:[%s4 + $0x10] sm:$0xff]
  %v361 = vld [vmem:[%s4 + $0x18] sm:$0xff]
  %v362 = vld [vmem:[%s4 + $0x20] sm:$0xff]
  %v363 = vld [vmem:[%s4 + $0x28] sm:$0xff]
  %v364 = vld [vmem:[%s4 + $0x30] sm:$0xff]
  %v365 = vld [vmem:[%s4 + $0x38] sm:$0xff]
  %v366 = vld [vmem:[%s4 + $0x40] sm:$0xff]
  %v367 = vld [vmem:[%s4 + $0x48] sm:$0xff]
  %v368 = vld [vmem:[%s4 + $0x50] sm:$0xff]
  %v369 = vld [vmem:[%s4 + $0x58] sm:$0xff]
  %v370 = vld [vmem:[%s5] sm:$0x1]
  %371 = vmatpush.msra.mxu0 0.0
  %372 = vmatpush.msra.mxu0 0.0
  %373 = vmatpush.msra.mxu0 0.0
  %374 = vmatpush.msra.mxu0 0.0
  %375 = vmatpush.msra.mxu0 0.0
  %376 = vmatpush.msra.mxu0 0.0
  %377 = vmatpush.msra.mxu0 0.0
  %378 = vmatpush.msra.mxu0 0.0
  %379 = vmatpush.msra.mxu0 %v357
  %380 = vmatpush.msra.mxu0 %v356
  %381 = vmatpush.msra.mxu0 %v355
  %382 = vmatpush.msra.mxu0 %v354
  %383 = vmatpush.msra.mxu0 %v353
  %384 = vmatpush.msra.mxu0 %v352
  %385 = vmatpush.msra.mxu0 %v351
  %386 = vmatpush.msra.mxu0 %v350
  %387 = vmatmul.f32.gmra.mxu0 %v62
  %v388 = vpop.f32.mrf.mxu0
  %v389 = vadd.f32 0.0, %v388
  %390 = vmatmul.f32.gmra.mxu0 %v65
  %v391 = vpop.f32.mrf.mxu0
  %v392 = vadd.f32 0.0, %v391
  %393 = vmatmul.f32.gmra.mxu0 %v68
  %v394 = vpop.f32.mrf.mxu0
  %v395 = vadd.f32 0.0, %v394
  %396 = vmatmul.f32.gmra.mxu0 %v71
  %v397 = vpop.f32.mrf.mxu0
  %v398 = vadd.f32 0.0, %v397
  %399 = vmatmul.f32.gmra.mxu0 %v74
  %v400 = vpop.f32.mrf.mxu0
  %v401 = vadd.f32 0.0, %v400
  %402 = vmatmul.f32.gmra.mxu0 %v77
  %v403 = vpop.f32.mrf.mxu0
  %v404 = vadd.f32 0.0, %v403
  %405 = vmatmul.f32.gmra.mxu0 %v80
  %v406 = vpop.f32.mrf.mxu0
  %v407 = vadd.f32 0.0, %v406
  %408 = vmatmul.f32.gmra.mxu0 %v83
  %v409 = vpop.f32.mrf.mxu0
  %v410 = vadd.f32 0.0, %v409
  %411 = vdwg.mxu0
  %412 = vmatpush.msra.mxu0 0.0
  %413 = vmatpush.msra.mxu0 0.0
  %414 = vmatpush.msra.mxu0 0.0
  %415 = vmatpush.msra.mxu0 0.0
  %416 = vmatpush.msra.mxu0 0.0
  %417 = vmatpush.msra.mxu0 0.0
  %418 = vmatpush.msra.mxu0 0.0
  %419 = vmatpush.msra.mxu0 0.0
  %420 = vmatpush.msra.mxu0 %v410
  %421 = vmatpush.msra.mxu0 %v407
  %422 = vmatpush.msra.mxu0 %v404
  %423 = vmatpush.msra.mxu0 %v401
  %424 = vmatpush.msra.mxu0 %v398
  %425 = vmatpush.msra.mxu0 %v395
  %426 = vmatpush.msra.mxu0 %v392
  %427 = vmatpush.msra.mxu0 %v389
  %428 = vmatmul.f32.gmra.mxu0 %v127
  %v429 = vpop.f32.mrf.mxu0
  %v430 = vadd.f32 0.0, %v429
  %431 = vmatmul.f32.gmra.mxu0 %v130
  %v432 = vpop.f32.mrf.mxu0
  %v433 = vadd.f32 0.0, %v432
  %434 = vmatmul.f32.gmra.mxu0 %v133
  %v435 = vpop.f32.mrf.mxu0
  %v436 = vadd.f32 0.0, %v435
  %437 = vmatmul.f32.gmra.mxu0 %v136
  %v438 = vpop.f32.mrf.mxu0
  %v439 = vadd.f32 0.0, %v438
  %440 = vmatmul.f32.gmra.mxu0 %v139
  %v441 = vpop.f32.mrf.mxu0
  %v442 = vadd.f32 0.0, %v441
  %443 = vmatmul.f32.gmra.mxu0 %v142
  %v444 = vpop.f32.mrf.mxu0
  %v445 = vadd.f32 0.0, %v444
  %446 = vmatmul.f32.gmra.mxu0 %v145
  %v447 = vpop.f32.mrf.mxu0
  %v448 = vadd.f32 0.0, %v447
  %449 = vmatmul.f32.gmra.mxu0 %v148
  %v450 = vpop.f32.mrf.mxu0
  %v451 = vadd.f32 0.0, %v450
  %452 = vdwg.mxu0
  %v453 = vsub.f32 %v430, %v350
  %v454 = vsub.f32 %v433, %v351
  %v455 = vsub.f32 %v436, %v352
  %v456 = vsub.f32 %v439, %v353
  %v457 = vsub.f32 %v442, %v354
  %v458 = vsub.f32 %v445, %v355
  %v459 = vsub.f32 %v448, %v356
  %v460 = vsub.f32 %v451, %v357
  %469 = vrot.lane.b32.xlu0 %v389, 32
  %v470 = vpop.permute.xlu0 %469
  %471 = vrot.lane.b32.xlu0 %v392, 32
  %v472 = vpop.permute.xlu0 %471
  %473 = vrot.lane.b32.xlu0 %v395, 32
  %v474 = vpop.permute.xlu0 %473
  %475 = vrot.lane.b32.xlu0 %v398, 32
  %v476 = vpop.permute.xlu0 %475
  %477 = vrot.lane.b32.xlu0 %v401, 32
  %v478 = vpop.permute.xlu0 %477
  %479 = vrot.lane.b32.xlu0 %v404, 32
  %v480 = vpop.permute.xlu0 %479
  %481 = vrot.lane.b32.xlu0 %v407, 32
  %v482 = vpop.permute.xlu0 %481
  %483 = vrot.lane.b32.xlu0 %v410, 32
  %v484 = vpop.permute.xlu0 %483
  %501 = vrot.lane.b32.xlu0 %v453, 64
  %v502 = vpop.permute.xlu0 %501
  %503 = vrot.lane.b32.xlu0 %v454, 64
  %v504 = vpop.permute.xlu0 %503
  %505 = vrot.lane.b32.xlu0 %v455, 64
  %v506 = vpop.permute.xlu0 %505
  %507 = vrot.lane.b32.xlu0 %v456, 64
  %v508 = vpop.permute.xlu0 %507
  %509 = vrot.lane.b32.xlu0 %v457, 64
  %v510 = vpop.permute.xlu0 %509
  %511 = vrot.lane.b32.xlu0 %v458, 64
  %v512 = vpop.permute.xlu0 %511
  %513 = vrot.lane.b32.xlu0 %v459, 64
  %v514 = vpop.permute.xlu0 %513
  %515 = vrot.lane.b32.xlu0 %v460, 64
  %v516 = vpop.permute.xlu0 %515
  %v525 = vsel %vm272, %v350, %v470
  %v526 = vsel %vm272, %v351, %v472
  %v527 = vsel %vm272, %v352, %v474
  %v528 = vsel %vm272, %v353, %v476
  %v529 = vsel %vm272, %v354, %v478
  %v530 = vsel %vm272, %v355, %v480
  %v531 = vsel %vm272, %v356, %v482
  %v532 = vsel %vm272, %v357, %v484
  %v533 = vsel %vm60, %v525, %v502
  %v534 = vsel %vm60, %v526, %v504
  %v535 = vsel %vm60, %v527, %v506
  %v536 = vsel %vm60, %v528, %v508
  %v537 = vsel %vm60, %v529, %v510
  %v538 = vsel %vm60, %v530, %v512
  %v539 = vsel %vm60, %v531, %v514
  %v540 = vsel %vm60, %v532, %v516
  %v542 = vperm.slane %v370, 0
  %vm544 = vcmask 785408
  %v546 = vsel %vm544, %v533, 0
  %v549 = vsel %vm544, %v534, 0
  %v552 = vsel %vm544, %v535, 0
  %v555 = vsel %vm544, %v536, 0
  %v558 = vsel %vm544, %v537, 0
  %v561 = vsel %vm544, %v538, 0
  %v564 = vsel %vm544, %v539, 0
  %v567 = vsel %vm544, %v540, 0
  %569 = vmatpush.msra.mxu0 0.0
  %570 = vmatpush.msra.mxu0 0.0
  %571 = vmatpush.msra.mxu0 0.0
  %572 = vmatpush.msra.mxu0 0.0
  %573 = vmatpush.msra.mxu0 %v369
  %574 = vmatpush.msra.mxu0 %v368
  %575 = vmatpush.msra.mxu0 %v367
  %576 = vmatpush.msra.mxu0 %v366
  %577 = vmatpush.msra.mxu0 %v365
  %578 = vmatpush.msra.mxu0 %v364
  %579 = vmatpush.msra.mxu0 %v363
  %580 = vmatpush.msra.mxu0 %v362
  %581 = vmatpush.msra.mxu0 %v361
  %582 = vmatpush.msra.mxu0 %v360
  %583 = vmatpush.msra.mxu0 %v359
  %584 = vmatpush.msra.mxu0 %v358
  %585 = vmatmul.f32.gmra.mxu0 %v546
  %v586 = vpop.f32.mrf.mxu0
  %v587 = vadd.f32 %v542, %v586
  %588 = vmatmul.f32.gmra.mxu0 %v549
  %v589 = vpop.f32.mrf.mxu0
  %v590 = vadd.f32 %v542, %v589
  %591 = vmatmul.f32.gmra.mxu0 %v552
  %v592 = vpop.f32.mrf.mxu0
  %v593 = vadd.f32 %v542, %v592
  %594 = vmatmul.f32.gmra.mxu0 %v555
  %v595 = vpop.f32.mrf.mxu0
  %v596 = vadd.f32 %v542, %v595
  %597 = vmatmul.f32.gmra.mxu0 %v558
  %v598 = vpop.f32.mrf.mxu0
  %v599 = vadd.f32 %v542, %v598
  %600 = vmatmul.f32.gmra.mxu0 %v561
  %v601 = vpop.f32.mrf.mxu0
  %v602 = vadd.f32 %v542, %v601
  %603 = vmatmul.f32.gmra.mxu0 %v564
  %v604 = vpop.f32.mrf.mxu0
  %v605 = vadd.f32 %v542, %v604
  %606 = vmatmul.f32.gmra.mxu0 %v567
  %v607 = vpop.f32.mrf.mxu0
  %v608 = vadd.f32 %v542, %v607
  %609 = vdwg.mxu0
  %v610 = vmax.f32 %v587, 0.0
  %v611 = vmax.f32 %v590, 0.0
  %v612 = vmax.f32 %v593, 0.0
  %v613 = vmax.f32 %v596, 0.0
  %v614 = vmax.f32 %v599, 0.0
  %v615 = vmax.f32 %v602, 0.0
  %v616 = vmax.f32 %v605, 0.0
  %v617 = vmax.f32 %v608, 0.0
  %v618 = vld [vmem:[%s6] sm:$0xff]
  %v619 = vld [vmem:[%s6 + $0x8] sm:$0xff]
  %v620 = vld [vmem:[%s6 + $0x10] sm:$0xff]
  %v621 = vld [vmem:[%s6 + $0x18] sm:$0xff]
  %v622 = vld [vmem:[%s6 + $0x20] sm:$0xff]
  %v623 = vld [vmem:[%s6 + $0x28] sm:$0xff]
  %v624 = vld [vmem:[%s6 + $0x30] sm:$0xff]
  %v625 = vld [vmem:[%s6 + $0x38] sm:$0xff]
  %v626 = vld [vmem:[%s6 + $0x40] sm:$0xff]
  %v627 = vld [vmem:[%s6 + $0x48] sm:$0xff]
  %v628 = vld [vmem:[%s6 + $0x50] sm:$0xff]
  %v629 = vld [vmem:[%s6 + $0x58] sm:$0xff]
  %v630 = vld [vmem:[%s7] sm:$0x1]
  %631 = vmatpush.msra.mxu0 0.0
  %632 = vmatpush.msra.mxu0 0.0
  %633 = vmatpush.msra.mxu0 0.0
  %634 = vmatpush.msra.mxu0 0.0
  %635 = vmatpush.msra.mxu0 0.0
  %636 = vmatpush.msra.mxu0 0.0
  %637 = vmatpush.msra.mxu0 0.0
  %638 = vmatpush.msra.mxu0 0.0
  %639 = vmatpush.msra.mxu0 %v617
  %640 = vmatpush.msra.mxu0 %v616
  %641 = vmatpush.msra.mxu0 %v615
  %642 = vmatpush.msra.mxu0 %v614
  %643 = vmatpush.msra.mxu0 %v613
  %644 = vmatpush.msra.mxu0 %v612
  %645 = vmatpush.msra.mxu0 %v611
  %646 = vmatpush.msra.mxu0 %v610
  %647 = vmatmul.f32.gmra.mxu0 %v62
  %v648 = vpop.f32.mrf.mxu0
  %v649 = vadd.f32 0.0, %v648
  %650 = vmatmul.f32.gmra.mxu0 %v65
  %v651 = vpop.f32.mrf.mxu0
  %v652 = vadd.f32 0.0, %v651
  %653 = vmatmul.f32.gmra.mxu0 %v68
  %v654 = vpop.f32.mrf.mxu0
  %v655 = vadd.f32 0.0, %v654
  %656 = vmatmul.f32.gmra.mxu0 %v71
  %v657 = vpop.f32.mrf.mxu0
  %v658 = vadd.f32 0.0, %v657
  %659 = vmatmul.f32.gmra.mxu0 %v74
  %v660 = vpop.f32.mrf.mxu0
  %v661 = vadd.f32 0.0, %v660
  %662 = vmatmul.f32.gmra.mxu0 %v77
  %v663 = vpop.f32.mrf.mxu0
  %v664 = vadd.f32 0.0, %v663
  %665 = vmatmul.f32.gmra.mxu0 %v80
  %v666 = vpop.f32.mrf.mxu0
  %v667 = vadd.f32 0.0, %v666
  %668 = vmatmul.f32.gmra.mxu0 %v83
  %v669 = vpop.f32.mrf.mxu0
  %v670 = vadd.f32 0.0, %v669
  %671 = vdwg.mxu0
  %672 = vmatpush.msra.mxu0 0.0
  %673 = vmatpush.msra.mxu0 0.0
  %674 = vmatpush.msra.mxu0 0.0
  %675 = vmatpush.msra.mxu0 0.0
  %676 = vmatpush.msra.mxu0 0.0
  %677 = vmatpush.msra.mxu0 0.0
  %678 = vmatpush.msra.mxu0 0.0
  %679 = vmatpush.msra.mxu0 0.0
  %680 = vmatpush.msra.mxu0 %v670
  %681 = vmatpush.msra.mxu0 %v667
  %682 = vmatpush.msra.mxu0 %v664
  %683 = vmatpush.msra.mxu0 %v661
  %684 = vmatpush.msra.mxu0 %v658
  %685 = vmatpush.msra.mxu0 %v655
  %686 = vmatpush.msra.mxu0 %v652
  %687 = vmatpush.msra.mxu0 %v649
  %688 = vmatmul.f32.gmra.mxu0 %v127
  %v689 = vpop.f32.mrf.mxu0
  %v690 = vadd.f32 0.0, %v689
  %691 = vmatmul.f32.gmra.mxu0 %v130
  %v692 = vpop.f32.mrf.mxu0
  %v693 = vadd.f32 0.0, %v692
  %694 = vmatmul.f32.gmra.mxu0 %v133
  %v695 = vpop.f32.mrf.mxu0
  %v696 = vadd.f32 0.0, %v695
  %697 = vmatmul.f32.gmra.mxu0 %v136
  %v698 = vpop.f32.mrf.mxu0
  %v699 = vadd.f32 0.0, %v698
  %700 = vmatmul.f32.gmra.mxu0 %v139
  %v701 = vpop.f32.mrf.mxu0
  %v702 = vadd.f32 0.0, %v701
  %703 = vmatmul.f32.gmra.mxu0 %v142
  %v704 = vpop.f32.mrf.mxu0
  %v705 = vadd.f32 0.0, %v704
  %706 = vmatmul.f32.gmra.mxu0 %v145
  %v707 = vpop.f32.mrf.mxu0
  %v708 = vadd.f32 0.0, %v707
  %709 = vmatmul.f32.gmra.mxu0 %v148
  %v710 = vpop.f32.mrf.mxu0
  %v711 = vadd.f32 0.0, %v710
  %712 = vdwg.mxu0
  %v713 = vsub.f32 %v690, %v610
  %v714 = vsub.f32 %v693, %v611
  %v715 = vsub.f32 %v696, %v612
  %v716 = vsub.f32 %v699, %v613
  %v717 = vsub.f32 %v702, %v614
  %v718 = vsub.f32 %v705, %v615
  %v719 = vsub.f32 %v708, %v616
  %v720 = vsub.f32 %v711, %v617
  %729 = vrot.lane.b32.xlu0 %v649, 32
  %v730 = vpop.permute.xlu0 %729
  %731 = vrot.lane.b32.xlu0 %v652, 32
  %v732 = vpop.permute.xlu0 %731
  %733 = vrot.lane.b32.xlu0 %v655, 32
  %v734 = vpop.permute.xlu0 %733
  %735 = vrot.lane.b32.xlu0 %v658, 32
  %v736 = vpop.permute.xlu0 %735
  %737 = vrot.lane.b32.xlu0 %v661, 32
  %v738 = vpop.permute.xlu0 %737
  %739 = vrot.lane.b32.xlu0 %v664, 32
  %v740 = vpop.permute.xlu0 %739
  %741 = vrot.lane.b32.xlu0 %v667, 32
  %v742 = vpop.permute.xlu0 %741
  %743 = vrot.lane.b32.xlu0 %v670, 32
  %v744 = vpop.permute.xlu0 %743
  %761 = vrot.lane.b32.xlu0 %v713, 64
  %v762 = vpop.permute.xlu0 %761
  %763 = vrot.lane.b32.xlu0 %v714, 64
  %v764 = vpop.permute.xlu0 %763
  %765 = vrot.lane.b32.xlu0 %v715, 64
  %v766 = vpop.permute.xlu0 %765
  %767 = vrot.lane.b32.xlu0 %v716, 64
  %v768 = vpop.permute.xlu0 %767
  %769 = vrot.lane.b32.xlu0 %v717, 64
  %v770 = vpop.permute.xlu0 %769
  %771 = vrot.lane.b32.xlu0 %v718, 64
  %v772 = vpop.permute.xlu0 %771
  %773 = vrot.lane.b32.xlu0 %v719, 64
  %v774 = vpop.permute.xlu0 %773
  %775 = vrot.lane.b32.xlu0 %v720, 64
  %v776 = vpop.permute.xlu0 %775
  %v785 = vsel %vm272, %v610, %v730
  %v786 = vsel %vm272, %v611, %v732
  %v787 = vsel %vm272, %v612, %v734
  %v788 = vsel %vm272, %v613, %v736
  %v789 = vsel %vm272, %v614, %v738
  %v790 = vsel %vm272, %v615, %v740
  %v791 = vsel %vm272, %v616, %v742
  %v792 = vsel %vm272, %v617, %v744
  %v793 = vsel %vm60, %v785, %v762
  %v794 = vsel %vm60, %v786, %v764
  %v795 = vsel %vm60, %v787, %v766
  %v796 = vsel %vm60, %v788, %v768
  %v797 = vsel %vm60, %v789, %v770
  %v798 = vsel %vm60, %v790, %v772
  %v799 = vsel %vm60, %v791, %v774
  %v800 = vsel %vm60, %v792, %v776
  %v802 = vperm.slane %v630, 0
  %v805 = vsel %vm544, %v793, 0
  %v808 = vsel %vm544, %v794, 0
  %v811 = vsel %vm544, %v795, 0
  %v814 = vsel %vm544, %v796, 0
  %v817 = vsel %vm544, %v797, 0
  %v820 = vsel %vm544, %v798, 0
  %v823 = vsel %vm544, %v799, 0
  %v826 = vsel %vm544, %v800, 0
  %828 = vmatpush.msra.mxu0 0.0
  %829 = vmatpush.msra.mxu0 0.0
  %830 = vmatpush.msra.mxu0 0.0
  %831 = vmatpush.msra.mxu0 0.0
  %832 = vmatpush.msra.mxu0 %v629
  %833 = vmatpush.msra.mxu0 %v628
  %834 = vmatpush.msra.mxu0 %v627
  %835 = vmatpush.msra.mxu0 %v626
  %836 = vmatpush.msra.mxu0 %v625
  %837 = vmatpush.msra.mxu0 %v624
  %838 = vmatpush.msra.mxu0 %v623
  %839 = vmatpush.msra.mxu0 %v622
  %840 = vmatpush.msra.mxu0 %v621
  %841 = vmatpush.msra.mxu0 %v620
  %842 = vmatpush.msra.mxu0 %v619
  %843 = vmatpush.msra.mxu0 %v618
  %844 = vmatmul.f32.gmra.mxu0 %v805
  %v845 = vpop.f32.mrf.mxu0
  %v846 = vadd.f32 %v802, %v845
  %847 = vmatmul.f32.gmra.mxu0 %v808
  %v848 = vpop.f32.mrf.mxu0
  %v849 = vadd.f32 %v802, %v848
  %850 = vmatmul.f32.gmra.mxu0 %v811
  %v851 = vpop.f32.mrf.mxu0
  %v852 = vadd.f32 %v802, %v851
  %853 = vmatmul.f32.gmra.mxu0 %v814
  %v854 = vpop.f32.mrf.mxu0
  %v855 = vadd.f32 %v802, %v854
  %856 = vmatmul.f32.gmra.mxu0 %v817
  %v857 = vpop.f32.mrf.mxu0
  %v858 = vadd.f32 %v802, %v857
  %859 = vmatmul.f32.gmra.mxu0 %v820
  %v860 = vpop.f32.mrf.mxu0
  %v861 = vadd.f32 %v802, %v860
  %862 = vmatmul.f32.gmra.mxu0 %v823
  %v863 = vpop.f32.mrf.mxu0
  %v864 = vadd.f32 %v802, %v863
  %865 = vmatmul.f32.gmra.mxu0 %v826
  %v866 = vpop.f32.mrf.mxu0
  %v867 = vadd.f32 %v802, %v866
  %868 = vdwg.mxu0
  %v869 = vmax.f32 %v846, 0.0
  %v870 = vmax.f32 %v849, 0.0
  %v871 = vmax.f32 %v852, 0.0
  %v872 = vmax.f32 %v855, 0.0
  %v873 = vmax.f32 %v858, 0.0
  %v874 = vmax.f32 %v861, 0.0
  %v875 = vmax.f32 %v864, 0.0
  %v876 = vmax.f32 %v867, 0.0
  %vm877 = vcmask 64512
  %878 = vst.msk [vmem:[%s8] sm:$0xff] %vm877, %v869
  %879 = vst.msk [vmem:[%s8 + $0x8] sm:$0xff] %vm877, %v870
  %880 = vst.msk [vmem:[%s8 + $0x10] sm:$0xff] %vm877, %v871
  %881 = vst.msk [vmem:[%s8 + $0x18] sm:$0xff] %vm877, %v872
  %882 = vst.msk [vmem:[%s8 + $0x20] sm:$0xff] %vm877, %v873
  %883 = vst.msk [vmem:[%s8 + $0x28] sm:$0xff] %vm877, %v874
  %884 = vst.msk [vmem:[%s8 + $0x30] sm:$0xff] %vm877, %v875
  %885 = vst.msk [vmem:[%s8 + $0x38] sm:$0xff] %vm877, %v876
  // Predicated region
  $region34: #{tpu_custom_call.1} parent=0 // pred_check
    _
  $region35: #{tpu_custom_call.1} parent=0 // pred_check_branch
    %887 = sbr.rel (0) target = $region37
  $region36: #{tpu_custom_call.1} parent=0 // pred_region
    _
  $region37: #{tpu_custom_call.1} parent=0 // pred_fallthru
    _
  // Predicated region
  $region38: #{tpu_custom_call.1} parent=0 // pred_check
    _
  $region39: #{tpu_custom_call.1} parent=0 // pred_check_branch
    %889 = sbr.rel (0) target = $region41
  $region40: #{tpu_custom_call.1} parent=0 // pred_region
    _
  $region41: #{tpu_custom_call.1} parent=0 // pred_fallthru
    _

</llo_original>
